<compile_context>
chip_gen: v6e
topology: v6e:2x2x1
jax: 0.10.0
libtpu: 0.0.40
codegen_flags: <defaults>
</compile_context>

<pallas_src>
import jax
import jax.numpy as jnp
from jax.experimental import pallas as pl
from jax.experimental.pallas import tpu as pltpu


def _embedding_learner_kernel(h_ref, t_ref, r_ref, norm_ref, score_ref):
    # h_ref/t_ref: (Bt, N, D)   r_ref: (Bt, rN, D) with rN in {1, N}
    # norm_ref: (Bt, 1, D)      score_ref: (Bt, N)   (lane-dense output)
    h = h_ref[...].astype(jnp.float32)
    t = t_ref[...].astype(jnp.float32)
    r = r_ref[...].astype(jnp.float32)
    nrm = norm_ref[...].astype(jnp.float32)     # broadcasts over the N axis

    h = h - jnp.sum(h * nrm, axis=-1, keepdims=True) * nrm
    t = t - jnp.sum(t * nrm, axis=-1, keepdims=True) * nrm

    d = h + r - t                               # r broadcasts over N if rN == 1
    sq = jnp.sum(d * d, axis=-1)                # (Bt, N)
    score_ref[...] = (-jnp.sqrt(sq)).astype(score_ref.dtype)


def embedding_learner(h, t, r, pos_num, norm):
    """h, t, norm: (B, N, 1, D); r: (B, rN, 1, D) with rN in {1, N}.
    Returns (p_score, n_score) exactly like the PyTorch module."""
    B, N, _, D = h.shape

    # Squeeze the size-1 axis; keep r at its natural width (no broadcast in HBM).
    h3 = h[:, :, 0, :]                          # (B, N, D)
    t3 = t[:, :, 0, :]                          # (B, N, D)
    r3 = r[:, :, 0, :]                          # (B, rN, D)
    rN = r3.shape[1]
    norm3 = norm[:, :1, 0, :]                   # (B, 1, D)  == norm[:, :1] selection

    # Coarse batch tile: take everything in one step when it fits a conservative
    # VMEM budget (double-buffered inputs + output); otherwise tile B in
    # multiples of 8 sublanes.
    itemsize = jnp.dtype(h.dtype).itemsize
    row_bytes = 2 * ((2 * N + rN + 1) * D + N) * itemsize
    vmem_budget = 12 * 1024 * 1024              # fits v5e/v6e/v7x scoped limits
    max_bt = max(1, vmem_budget // row_bytes)
    if B <= max_bt:
        bt = B
    else:
        bt = max(8, (max_bt // 8) * 8)
    grid = (pl.cdiv(B, bt),)

    score = pl.pallas_call(
        _embedding_learner_kernel,
        out_shape=jax.ShapeDtypeStruct((B, N), h.dtype),
        grid=grid,
        in_specs=[
            pl.BlockSpec((bt, N, D), lambda i: (i, 0, 0)),
            pl.BlockSpec((bt, N, D), lambda i: (i, 0, 0)),
            pl.BlockSpec((bt, rN, D), lambda i: (i, 0, 0)),
            pl.BlockSpec((bt, 1, D), lambda i: (i, 0, 0)),
        ],
        out_specs=pl.BlockSpec((bt, N), lambda i: (i, 0)),
        compiler_params=pltpu.CompilerParams(
            dimension_semantics=(
                ("arbitrary",) if grid[0] == 1 else ("parallel",)),
            vmem_limit_bytes=32 * 1024 * 1024,
        ),
    )(h3, t3, r3, norm3)

    p_score = score[:, :pos_num]
    n_score = score[:, pos_num:]
    return p_score, n_score


def _reference(h, t, r, pos_num, norm):
    norm = norm[:, :1, :, :]
    h = h - jnp.sum(h * norm, -1, keepdims=True) * norm
    t = t - jnp.sum(t * norm, -1, keepdims=True) * norm
    score = -jnp.sqrt(jnp.sum((h + r - t) ** 2, axis=-1))[:, :, 0]
    return score[:, :pos_num], score[:, pos_num:]


if __name__ == "__main__":
    # Small shapes consistent with the forward: B=2 tasks, N=8 candidates
    # (pos_num=4 positives + 4 negatives), embedding dim D=32.
    B, N, D = 2, 8, 32
    pos_num = 4

    key = jax.random.PRNGKey(0)
    kh, kt, kr, kn = jax.random.split(key, 4)
    h = jax.random.normal(kh, (B, N, 1, D), dtype=jnp.float32)
    t = jax.random.normal(kt, (B, N, 1, D), dtype=jnp.float32)
    r = jax.random.normal(kr, (B, N, 1, D), dtype=jnp.float32)
    norm = jax.random.normal(kn, (B, N, 1, D), dtype=jnp.float32)

    p_score, n_score = embedding_learner(h, t, r, pos_num, norm)
    jax.block_until_ready((p_score, n_score))

    p_ref, n_ref = _reference(h, t, r, pos_num, norm)
    assert p_score.shape == (B, pos_num) and n_score.shape == (B, N - pos_num)
    assert jnp.allclose(p_score, p_ref, atol=1e-5, rtol=1e-5)
    assert jnp.allclose(n_score, n_ref, atol=1e-5, rtol=1e-5)

    print("KERNEL_OK")
</pallas_src>

<mosaic_0001>
module attributes {stable_mosaic.version = 11 : i64} {
  func.func @_embedding_learner_kernel(%arg0: i32, %arg1: memref<2x8x32xf32, #tpu.memory_space<vmem>>, %arg2: memref<2x8x32xf32, #tpu.memory_space<vmem>>, %arg3: memref<2x8x32xf32, #tpu.memory_space<vmem>>, %arg4: memref<2x1x32xf32, #tpu.memory_space<vmem>>, %arg5: memref<2x8xf32, #tpu.memory_space<vmem>>) attributes {dimension_semantics = [#tpu.dimension_semantics<arbitrary>], iteration_bounds = array<i64: 1>, scalar_prefetch = 0 : i64, scratch_operands = 0 : i64, tpu.core_type = #tpu.core_type<tc>, window_params = [{transform_indices = @transform_0, window_bounds = array<i64: 2, 8, 32>}, {transform_indices = @transform_1, window_bounds = array<i64: 2, 8, 32>}, {transform_indices = @transform_2, window_bounds = array<i64: 2, 8, 32>}, {transform_indices = @transform_3, window_bounds = array<i64: 2, 1, 32>}, {transform_indices = @transform_4, window_bounds = array<i64: 2, 8>}]} {
    %c0 = arith.constant 0 : index
    %c0_0 = arith.constant 0 : index
    %c0_1 = arith.constant 0 : index
    %0 = vector.load %arg1[%c0, %c0_0, %c0_1] : memref<2x8x32xf32, #tpu.memory_space<vmem>>, vector<2x8x32xf32>
    %c0_2 = arith.constant 0 : index
    %c0_3 = arith.constant 0 : index
    %c0_4 = arith.constant 0 : index
    %1 = vector.load %arg2[%c0_2, %c0_3, %c0_4] : memref<2x8x32xf32, #tpu.memory_space<vmem>>, vector<2x8x32xf32>
    %c0_5 = arith.constant 0 : index
    %c0_6 = arith.constant 0 : index
    %c0_7 = arith.constant 0 : index
    %2 = vector.load %arg3[%c0_5, %c0_6, %c0_7] : memref<2x8x32xf32, #tpu.memory_space<vmem>>, vector<2x8x32xf32>
    %c0_8 = arith.constant 0 : index
    %c0_9 = arith.constant 0 : index
    %c0_10 = arith.constant 0 : index
    %3 = vector.load %arg4[%c0_8, %c0_9, %c0_10] : memref<2x1x32xf32, #tpu.memory_space<vmem>>, vector<2x1x32xf32>
    %4 = vector.broadcast %3 : vector<2x1x32xf32> to vector<2x8x32xf32>
    %5 = arith.mulf %0, %4 : vector<2x8x32xf32>
    %cst = arith.constant dense<0.000000e+00> : vector<2x8xf32>
    %6 = vector.multi_reduction <add>, %5, %cst [2] : vector<2x8x32xf32> to vector<2x8xf32>
    %7 = vector.shape_cast %6 : vector<2x8xf32> to vector<2x8x1xf32>
    %8 = vector.broadcast %7 : vector<2x8x1xf32> to vector<2x8x32xf32>
    %9 = vector.broadcast %3 : vector<2x1x32xf32> to vector<2x8x32xf32>
    %10 = arith.mulf %8, %9 : vector<2x8x32xf32>
    %11 = arith.subf %0, %10 : vector<2x8x32xf32>
    %12 = vector.broadcast %3 : vector<2x1x32xf32> to vector<2x8x32xf32>
    %13 = arith.mulf %1, %12 : vector<2x8x32xf32>
    %cst_11 = arith.constant dense<0.000000e+00> : vector<2x8xf32>
    %14 = vector.multi_reduction <add>, %13, %cst_11 [2] : vector<2x8x32xf32> to vector<2x8xf32>
    %15 = vector.shape_cast %14 : vector<2x8xf32> to vector<2x8x1xf32>
    %16 = vector.broadcast %15 : vector<2x8x1xf32> to vector<2x8x32xf32>
    %17 = vector.broadcast %3 : vector<2x1x32xf32> to vector<2x8x32xf32>
    %18 = arith.mulf %16, %17 : vector<2x8x32xf32>
    %19 = arith.subf %1, %18 : vector<2x8x32xf32>
    %20 = arith.addf %11, %2 : vector<2x8x32xf32>
    %21 = arith.subf %20, %19 : vector<2x8x32xf32>
    %22 = arith.mulf %21, %21 : vector<2x8x32xf32>
    %cst_12 = arith.constant dense<0.000000e+00> : vector<2x8xf32>
    %23 = vector.multi_reduction <add>, %22, %cst_12 [2] : vector<2x8x32xf32> to vector<2x8xf32>
    %24 = math.sqrt %23 : vector<2x8xf32>
    %cst_13 = arith.constant 0.000000e+00 : f32
    %25 = vector.broadcast %cst_13 : f32 to vector<2x8xf32>
    %26 = arith.subf %25, %24 : vector<2x8xf32>
    %c0_14 = arith.constant 0 : index
    %c0_15 = arith.constant 0 : index
    %27 = vector.load %arg5[%c0_14, %c0_15] : memref<2x8xf32, #tpu.memory_space<vmem>>, vector<2x8xf32>
    tpu.vector_store %arg5[%c0_14, %c0_15], %26 {strides = array<i32>} : memref<2x8xf32, #tpu.memory_space<vmem>>, vector<2x8xf32>,
    return
  }
  func.func @transform_0(%arg0: i32) -> (i32, i32, i32) {
    %c0_i32 = arith.constant 0 : i32
    %c0_i32_0 = arith.constant 0 : i32
    %c0_i32_1 = arith.constant 0 : i32
    return %arg0, %c0_i32, %c0_i32_0 : i32, i32, i32
  }
  func.func @transform_1(%arg0: i32) -> (i32, i32, i32) {
    %c0_i32 = arith.constant 0 : i32
    %c0_i32_0 = arith.constant 0 : i32
    %c0_i32_1 = arith.constant 0 : i32
    return %arg0, %c0_i32, %c0_i32_0 : i32, i32, i32
  }
  func.func @transform_2(%arg0: i32) -> (i32, i32, i32) {
    %c0_i32 = arith.constant 0 : i32
    %c0_i32_0 = arith.constant 0 : i32
    %c0_i32_1 = arith.constant 0 : i32
    return %arg0, %c0_i32, %c0_i32_0 : i32, i32, i32
  }
  func.func @transform_3(%arg0: i32) -> (i32, i32, i32) {
    %c0_i32 = arith.constant 0 : i32
    %c0_i32_0 = arith.constant 0 : i32
    %c0_i32_1 = arith.constant 0 : i32
    return %arg0, %c0_i32, %c0_i32_0 : i32, i32, i32
  }
  func.func @transform_4(%arg0: i32) -> (i32, i32) {
    %c0_i32 = arith.constant 0 : i32
    %c0_i32_0 = arith.constant 0 : i32
    return %arg0, %c0_i32 : i32, i32
  }
}

</mosaic_0001>

<llo_original>
// kernel: tpu_custom_call.1
$region0: #{tpu_custom_call.1}
  #allocation0 [shape = 'u32[]', space=smem, size = 0x4, offset = 0x4, fixed_abs, tag = 'smem constant byte address 0x4 - core index']
  #allocation1 [shape = 'u32[144,128]{1,0:T(1,128)}', space=vmem, size = 0x12000, scoped, tag = 'internal scratch']
  %s0 = inlined_call_operand.hbm [shape: f32[2,8,32], index: 0, kind: input, shape index: {}]
  %s1 = inlined_call_operand.hbm [shape: f32[2,8,32], index: 1, kind: input, shape index: {}]
  %s2 = inlined_call_operand.hbm [shape: f32[2,8,32], index: 2, kind: input, shape index: {}]
  %s3 = inlined_call_operand.vmem [shape: f32[2,1,32], index: 3, kind: input, shape index: {}]
  %s4 = inlined_call_operand.hbm [shape: f32[2,8], index: 4, kind: output, shape index: {}]
  %s5 = sld [smem:[#allocation0]]
  $region38: #{tpu_custom_call.1} parent=0
    _
  %s7 = ssub.s32 1, %s5
  %s8 = scalar_select 0, %s7, %s5
  $region1: #{tpu_custom_call.1} parent=0
    #allocation2 [shape = 'u8[8192]{0}', space=vmem, size = 0x2000, scoped, tag = 'input window, operand 0, single buffered']
    #allocation3 [shape = 's32[1]{0}', space=sflag, size = 0x4, scoped, tag = 'scoped memory for tpu_custom_call.1']
    #allocation4 [shape = 's32[1]{0}', space=sflag, size = 0x4, scoped, tag = 'scoped memory for tpu_custom_call.1']
    #allocation5 [shape = 'u8[8192]{0}', space=vmem, size = 0x2000, scoped, tag = 'input window, operand 1, single buffered']
    #allocation6 [shape = 's32[1]{0}', space=sflag, size = 0x4, scoped, tag = 'scoped memory for tpu_custom_call.1']
    #allocation7 [shape = 'u8[8192]{0}', space=vmem, size = 0x2000, scoped, tag = 'input window, operand 2, single buffered']
    #allocation8 [shape = 'u8[1024]{0}', space=vmem, size = 0x400, scoped, tag = 'output window, operand 0, single buffered']
    %9 = vsyncpa [#allocation3], 0
    %10 = vsyncpa [#allocation6], 0
    %11 = vsyncpa [#allocation4], 0
    // Predicated region
    $region2: #{tpu_custom_call.1} parent=1 // pred_check
      _
    $region3: #{tpu_custom_call.1} parent=1 // pred_check_branch
      %13 = sbr.rel (0) target = $region5
    $region4: #{tpu_custom_call.1} parent=1 // pred_region
      %s15 = ssub.s32 256, 256
      %16 = vsyncadd [#allocation3], %s15
      %s17 = sshll.u32 [#allocation2], 4
      %s18 = int_to_ptr.vmem [resolvable:$true] %s17
      %23 = dma.hbm_to_vmem [thread:$0]  %s0, 256, %s18, [#allocation3], 128, 128, 8
    $region5: #{tpu_custom_call.1} parent=1 // pred_fallthru
      _
    // Predicated region
    $region6: #{tpu_custom_call.1} parent=1 // pred_check
      _
    $region7: #{tpu_custom_call.1} parent=1 // pred_check_branch
      %25 = sbr.rel (0) target = $region9
    $region8: #{tpu_custom_call.1} parent=1 // pred_region
      %s27 = ssub.s32 256, 256
      %28 = vsyncadd [#allocation6], %s27
      %s29 = sshll.u32 [#allocation5], 4
      %s30 = int_to_ptr.vmem [resolvable:$true] %s29
      %35 = dma.hbm_to_vmem [thread:$0]  %s1, 256, %s30, [#allocation6], 128, 128, 8
    $region9: #{tpu_custom_call.1} parent=1 // pred_fallthru
      _
    // Predicated region
    $region10: #{tpu_custom_call.1} parent=1 // pred_check
      _
    $region11: #{tpu_custom_call.1} parent=1 // pred_check_branch
      %37 = sbr.rel (0) target = $region13
    $region12: #{tpu_custom_call.1} parent=1 // pred_region
      %s39 = ssub.s32 256, 256
      %40 = vsyncadd [#allocation6], %s39
      %s41 = sshll.u32 [#allocation7], 4
      %s42 = int_to_ptr.vmem [resolvable:$true] %s41
      %47 = dma.hbm_to_vmem [thread:$0]  %s2, 256, %s42, [#allocation6], 128, 128, 8
    $region13: #{tpu_custom_call.1} parent=1 // pred_fallthru
      _
    // Predicated region
    $region14: #{tpu_custom_call.1} parent=1 // pred_check
      _
    $region15: #{tpu_custom_call.1} parent=1 // pred_check_branch
      %49 = sbr.rel (0) target = $region17
    $region16: #{tpu_custom_call.1} parent=1 // pred_region
      _
    $region17: #{tpu_custom_call.1} parent=1 // pred_fallthru
      _
    // Predicated region
    $region18: #{tpu_custom_call.1} parent=1 // pred_check
      _
    $region19: #{tpu_custom_call.1} parent=1 // pred_check_branch
      %51 = sbr.rel (0) target = $region21
    $region20: #{tpu_custom_call.1} parent=1 // pred_region
      %52 = dma.done [#allocation3], 256
    $region21: #{tpu_custom_call.1} parent=1 // pred_fallthru
      _
    // Predicated region
    $region22: #{tpu_custom_call.1} parent=1 // pred_check
      _
    $region23: #{tpu_custom_call.1} parent=1 // pred_check_branch
      %54 = sbr.rel (0) target = $region25
    $region24: #{tpu_custom_call.1} parent=1 // pred_region
      %55 = dma.done [#allocation6], 256
    $region25: #{tpu_custom_call.1} parent=1 // pred_fallthru
      _
    // Predicated region
    $region26: #{tpu_custom_call.1} parent=1 // pred_check
      _
    $region27: #{tpu_custom_call.1} parent=1 // pred_check_branch
      %57 = sbr.rel (0) target = $region29
    $region28: #{tpu_custom_call.1} parent=1 // pred_region
      %58 = dma.done [#allocation6], 256
    $region29: #{tpu_custom_call.1} parent=1 // pred_fallthru
      _
    %v59 = vld [vmem:[#allocation2] sm:$0xff]
    %v60 = vld [vmem:[#allocation2 + $0x8] sm:$0xff]
    %v61 = vld [vmem:[#allocation5] sm:$0xff]
    %v62 = vld [vmem:[#allocation5 + $0x8] sm:$0xff]
    %v63 = vld [vmem:[#allocation7] sm:$0xff]
    %v64 = vld [vmem:[#allocation7 + $0x8] sm:$0xff]
    %v65 = vld [vmem:[%s3] sm:$0x1]
    %v66 = vld [vmem:[%s3 + $0x1] sm:$0x1]
    %v69 = vlaneseq
    %v70 = vshrl.u32 %v69, 7
    %v71 = vsub.s32 0, %v70
    %v72 = vrot.slane %v65, %v71
    %v73 = vlaneseq
    %v74 = vshrl.u32 %v73, 7
    %v75 = vsub.s32 0, %v74
    %v76 = vrot.slane %v66, %v75
    %v79 = vmul.f32 %v59, %v72
    %v80 = vmul.f32 %v60, %v76
    %vm81 = vcmask 261120
    %v82 = vsel %vm81, %v79, 0.0
    %83 = vadd.xlane.f32.xlu0 %v82
    %v84 = vpop.xlane.xlu0 %83
    %v85 = vsel %vm81, %v80, 0.0
    %86 = vadd.xlane.f32.xlu0 %v85
    %v87 = vpop.xlane.xlu0 %86
    %v88 = vmul.f32 %v84, %v72
    %v89 = vmul.f32 %v87, %v76
    %v90 = vsub.f32 %v59, %v88
    %v91 = vsub.f32 %v60, %v89
    %v92 = vmul.f32 %v61, %v72
    %v93 = vmul.f32 %v62, %v76
    %v94 = vsel %vm81, %v92, 0.0
    %95 = vadd.xlane.f32.xlu0 %v94
    %v96 = vpop.xlane.xlu0 %95
    %v97 = vsel %vm81, %v93, 0.0
    %98 = vadd.xlane.f32.xlu0 %v97
    %v99 = vpop.xlane.xlu0 %98
    %v100 = vmul.f32 %v96, %v72
    %v101 = vmul.f32 %v99, %v76
    %v102 = vsub.f32 %v61, %v100
    %v103 = vsub.f32 %v62, %v101
    %v104 = vadd.f32 %v90, %v63
    %v105 = vadd.f32 %v91, %v64
    %v106 = vsub.f32 %v104, %v102
    %v107 = vsub.f32 %v105, %v103
    %v108 = vmul.f32 %v106, %v106
    %v109 = vmul.f32 %v107, %v107
    %v110 = vsel %vm81, %v108, 0.0
    %111 = vadd.xlane.f32.xlu0 %v110
    %v112 = vpop.xlane.xlu0 %111
    %v113 = vsel %vm81, %v109, 0.0
    %114 = vadd.xlane.f32.xlu0 %v113
    %v115 = vpop.xlane.xlu0 %114
    %v116 = vrsqrt.pop %v112
    %v117 = vmul.f32 %v112, %v116
    %vm118 = vcmp.eq.f32.partialorder %v112, inf
    %v119 = vsel %vm118, %v112, %v117
    %vm120 = vcmp.eq.f32.partialorder %v112, 0.0
    %v121 = vand.u32 %v112, 2147483648
    %v122 = vsel %vm120, %v121, %v119
    %v123 = vrsqrt.pop %v115
    %v124 = vmul.f32 %v115, %v123
    %vm125 = vcmp.eq.f32.partialorder %v115, inf
    %v126 = vsel %vm125, %v115, %v124
    %vm127 = vcmp.eq.f32.partialorder %v115, 0.0
    %v128 = vand.u32 %v115, 2147483648
    %v129 = vsel %vm127, %v128, %v126
    %v130 = vsub.f32 0.0, %v122
    %v131 = vsub.f32 0.0, %v129
    %v134 = vlaneseq
    %v135 = vand.u32 %v134, 127
    %v136 = vlaneseq
    %v137 = vshrl.u32 %v136, 7
    %v138 = vsub.s32 %v135, %v137
    %v139 = vrot.slane %v130, %v138
    %v140 = vlaneseq
    %v141 = vshrl.u32 %v140, 7
    %v142 = vsub.s32 %v135, %v141
    %v143 = vrot.slane %v131, %v142
    %vm144 = vcmask 1041409
    %v145 = vsel %vm144, %v143, %v139
    %vm147 = vcmask 58368
    %148 = vst.msk [vmem:[#allocation8] sm:$0x3] %vm147, %v145
    // Predicated region
    $region30: #{tpu_custom_call.1} parent=1 // pred_check
      _
    $region31: #{tpu_custom_call.1} parent=1 // pred_check_branch
      %150 = sbr.rel (0) target = $region33
    $region32: #{tpu_custom_call.1} parent=1 // pred_region
      %s152 = ssub.s32 32, 32
      %153 = vsyncadd [#allocation4], %s152
      %s155 = sshll.u32 [#allocation8], 4
      %s156 = int_to_ptr.vmem [resolvable:$true] %s155
      %158 = dma.vmem_to_hbm [thread:$0]  %s156, 32, %s4, [#allocation4]
    $region33: #{tpu_custom_call.1} parent=1 // pred_fallthru
      _
    // Predicated region
    $region34: #{tpu_custom_call.1} parent=1 // pred_check
      _
    $region35: #{tpu_custom_call.1} parent=1 // pred_check_branch
      %160 = sbr.rel (0) target = $region37
    $region36: #{tpu_custom_call.1} parent=1 // pred_region
      %161 = dma.done [#allocation4], 32
    $region37: #{tpu_custom_call.1} parent=1 // pred_fallthru
      _
    %162 = vsyncpa [#allocation3], 1
    %163 = vsyncpa [#allocation6], 1
    %164 = vsyncpa [#allocation4], 1

</llo_original>
